<compile_context>
chip_gen: v7x
topology: tpu7x:2x2x1
jax: 0.10.0
libtpu: 0.0.40
codegen_flags: <defaults>
</compile_context>

<pallas_src>
import functools

import jax
import jax.numpy as jnp
from jax.experimental import pallas as pl
from jax.experimental.pallas import tpu as pltpu

# 128-aligned tiles map cleanly onto v5e's 4x128^2 MXU and work fine on v6e/v7x.
# Per-step VMEM footprint is <1 MiB, so double-buffered pipelines fit v7x's
# smaller (64 MiB physical / 32 MiB scoped) VMEM with lots of headroom.
# For large graphs on v6e (128 MiB VMEM) TM/TK can be raised to 512-1024.
TM = 128        # node-row tile   (grid axis 0, "parallel")
TK = 128        # A_hat column / reduction tile (grid axis 1, "arbitrary")
C_PAD = 128     # class dim padded to a full lane width -> unmasked vector stores
NEG_BIG = -1e30


def _gcn_layer1_kernel(a_ref, x_ref, w1_ref, b1_ref, w2p_ref, o_ref, acc_ref):
    """One row tile of  HW2 = relu((A_hat @ X) @ W1 + b1) @ W2_pad.

    The dominant N^2 contraction is done as A @ X first (C_in < hidden), with
    bf16 MXU operands accumulated into an f32 VMEM scratch across the K axis.
    W2 is folded into the finalize so the inter-layer activation is a
    lane-dense [N, 128] bf16 slab.
    """
    k = pl.program_id(1)

    @pl.when(k == 0)
    def _init():
        acc_ref[...] = jnp.zeros_like(acc_ref)

    acc_ref[...] += jnp.dot(a_ref[...], x_ref[...],
                            preferred_element_type=jnp.float32)

    @pl.when(k == pl.num_programs(1) - 1)
    def _finalize():
        ax = acc_ref[...]                                       # [TM, C_in] f32
        h = jnp.dot(ax.astype(jnp.bfloat16), w1_ref[...],
                    preferred_element_type=jnp.float32) + b1_ref[...]
        h = jnp.maximum(h, 0.0)                                 # ReLU (f32)
        hw2 = jnp.dot(h.astype(jnp.bfloat16), w2p_ref[...],
                      preferred_element_type=jnp.float32)       # [TM, C_PAD]
        o_ref[...] = hw2.astype(o_ref.dtype)


def _gcn_layer2_kernel(a_ref, hw_ref, amean_ref, b2p_ref, o_ref,
                       acc_ref, mean_ref, *, use_pair_norm, c_out):
    """One row tile of  Z = A_hat @ HW2 + b2, then optional PairNorm + log_softmax."""
    k = pl.program_id(1)

    @pl.when(k == 0)
    def _init():
        acc_ref[...] = jnp.zeros_like(acc_ref)
        if use_pair_norm:
            mean_ref[...] = jnp.zeros_like(mean_ref)

    acc_ref[...] += jnp.dot(a_ref[...], hw_ref[...],
                            preferred_element_type=jnp.float32)
    if use_pair_norm:
        # Global column mean of Z over all nodes: colmean(A_hat) @ HW2 (+ b2 later).
        # amean_ref is a [TK, 1] column (zero on padded rows) -> VPU mul + sublane reduce.
        mean_ref[...] += jnp.sum(hw_ref[...].astype(jnp.float32) * amean_ref[...],
                                 axis=0, keepdims=True)

    @pl.when(k == pl.num_programs(1) - 1)
    def _finalize():
        z = acc_ref[...] + b2p_ref[...]                         # [TM, C_PAD] f32
        if use_pair_norm:
            col_mean = mean_ref[...] + b2p_ref[...]             # global mean over nodes
            zc = z - col_mean
            # Padded class lanes of zc are exactly 0, so they don't perturb the norm.
            inv = jax.lax.rsqrt(1e-6 + jnp.sum(zc * zc, axis=1, keepdims=True))
            z = zc * inv
        # Mask padded class lanes, then log_softmax over the class axis (dim=1).
        lane = jax.lax.broadcasted_iota(jnp.int32, z.shape, 1)
        z = jnp.where(lane < c_out, z, NEG_BIG)
        m = jnp.max(z, axis=1, keepdims=True)
        shifted = z - m
        lse = jnp.log(jnp.sum(jnp.exp(shifted), axis=1, keepdims=True))
        o_ref[...] = shifted - lse


def _round_up(v, m):
    return ((v + m - 1) // m) * m


def gcn_forward(a_hat, x, w1, b1, w2, b2, *, use_pair_norm=False):
    """GCN forward: relu(GCNConv1) -> GCNConv2 -> [PairNorm 'PN-SI'] -> log_softmax."""
    n, c_in = x.shape
    hidden = w1.shape[1]
    c_out = w2.shape[1]
    assert c_out <= C_PAD

    n_pad = _round_up(n, max(TM, TK))

    # ---- padding / dtype glue (plain JAX) ----
    a_p = jnp.zeros((n_pad, n_pad), jnp.float32).at[:n, :n].set(a_hat)
    x_p = jnp.zeros((n_pad, c_in), jnp.float32).at[:n, :].set(x)
    w2_p = jnp.zeros((hidden, C_PAD), jnp.float32).at[:, :c_out].set(w2)
    b2_p = jnp.zeros((1, C_PAD), jnp.float32).at[:, :c_out].set(b2)
    # Column mean of A_hat over the *real* rows, laid out as an [n_pad, 1] column.
    amean = jnp.zeros((n_pad, 1), jnp.float32).at[:n, 0].set(jnp.mean(a_hat, axis=0))

    # bf16 MXU operands; f32 accumulation happens inside the kernels.
    a_bf = a_p.astype(jnp.bfloat16)
    x_bf = x_p.astype(jnp.bfloat16)
    w1_bf = w1.astype(jnp.bfloat16)
    w2p_bf = w2_p.astype(jnp.bfloat16)

    grid = (n_pad // TM, n_pad // TK)
    cparams = pltpu.CompilerParams(
        dimension_semantics=("parallel", "arbitrary"),
        vmem_limit_bytes=32 * 1024 * 1024,
    )

    # ---- layer 1 (+ folded W2):  HW2 = relu((A @ X) @ W1 + b1) @ W2_pad ----
    hw2 = pl.pallas_call(
        _gcn_layer1_kernel,
        out_shape=jax.ShapeDtypeStruct((n_pad, C_PAD), jnp.bfloat16),
        grid_spec=pltpu.PrefetchScalarGridSpec(
            num_scalar_prefetch=0,
            grid=grid,
            in_specs=[
                pl.BlockSpec((TM, TK), lambda i, k: (i, k)),         # A_hat
                pl.BlockSpec((TK, c_in), lambda i, k: (k, 0)),       # X
                pl.BlockSpec((c_in, hidden), lambda i, k: (0, 0)),   # W1
                pl.BlockSpec((1, hidden), lambda i, k: (0, 0)),      # b1
                pl.BlockSpec((hidden, C_PAD), lambda i, k: (0, 0)),  # W2 (padded)
            ],
            out_specs=pl.BlockSpec((TM, C_PAD), lambda i, k: (i, 0)),
            scratch_shapes=[pltpu.VMEM((TM, c_in), jnp.float32)],
        ),
        compiler_params=cparams,
    )(a_bf, x_bf, w1_bf, b1, w2p_bf)

    # ---- layer 2 + PairNorm + log_softmax ----
    kernel2 = functools.partial(_gcn_layer2_kernel,
                                use_pair_norm=use_pair_norm, c_out=c_out)
    logp = pl.pallas_call(
        kernel2,
        out_shape=jax.ShapeDtypeStruct((n_pad, C_PAD), jnp.float32),
        grid_spec=pltpu.PrefetchScalarGridSpec(
            num_scalar_prefetch=0,
            grid=grid,
            in_specs=[
                pl.BlockSpec((TM, TK), lambda i, k: (i, k)),         # A_hat
                pl.BlockSpec((TK, C_PAD), lambda i, k: (k, 0)),      # HW2
                pl.BlockSpec((TK, 1), lambda i, k: (k, 0)),          # colmean(A_hat)
                pl.BlockSpec((1, C_PAD), lambda i, k: (0, 0)),       # b2 (padded)
            ],
            out_specs=pl.BlockSpec((TM, C_PAD), lambda i, k: (i, 0)),
            scratch_shapes=[pltpu.VMEM((TM, C_PAD), jnp.float32),
                            pltpu.VMEM((1, C_PAD), jnp.float32)],
        ),
        compiler_params=cparams,
    )(a_bf, hw2, amean, b2_p)

    return logp[:n, :c_out]


def build_normalized_adjacency(edge_index, num_nodes):
    """Dense A_hat = D^{-1/2} (A + I) D^{-1/2} (glue, plain JAX)."""
    src, dst = edge_index[0], edge_index[1]
    a = jnp.zeros((num_nodes, num_nodes), dtype=jnp.float32)
    a = a.at[dst, src].set(1.0)                       # message src -> dst
    # add *remaining* self loops (don't double-count if an edge is already a self loop)
    a = jnp.maximum(a, jnp.eye(num_nodes, dtype=jnp.float32))
    deg = jnp.sum(a, axis=1)
    d_inv_sqrt = jnp.where(deg > 0, 1.0 / jnp.sqrt(deg), 0.0)
    return a * d_inv_sqrt[:, None] * d_inv_sqrt[None, :]


def glorot(key, shape):
    limit = jnp.sqrt(6.0 / (shape[0] + shape[1]))
    return jax.random.uniform(key, shape, jnp.float32, -limit, limit)


def jax_reference(a_hat, x, w1, b1, w2, b2, use_pair_norm=False):
    h = jnp.maximum(a_hat @ (x @ w1) + b1, 0.0)
    z = a_hat @ (h @ w2) + b2
    if use_pair_norm:
        zc = z - jnp.mean(z, axis=0, keepdims=True)
        z = zc / jnp.sqrt(1e-6 + jnp.sum(zc * zc, axis=1, keepdims=True))
    return jax.nn.log_softmax(z, axis=1)


if __name__ == "__main__":
    key = jax.random.PRNGKey(0)
    N, C_IN, HIDDEN, C_OUT, E = 256, 16, 32, 8, 1024   # grid = (2, 2) row x K tiles

    k_x, k_e1, k_e2, k_w1, k_w2 = jax.random.split(key, 5)

    x = jax.random.normal(k_x, (N, C_IN), dtype=jnp.float32)
    edge_index = jnp.stack([
        jax.random.randint(k_e1, (E,), 0, N),
        jax.random.randint(k_e2, (E,), 0, N),
    ]).astype(jnp.int32)

    # GCNConv-style init: glorot weights, zero bias.
    w1 = glorot(k_w1, (C_IN, HIDDEN))
    b1 = jnp.zeros((1, HIDDEN), dtype=jnp.float32)
    w2 = glorot(k_w2, (HIDDEN, C_OUT))
    b2 = jnp.zeros((1, C_OUT), dtype=jnp.float32)

    a_hat = build_normalized_adjacency(edge_index, N)

    out = jax.block_until_ready(
        gcn_forward(a_hat, x, w1, b1, w2, b2, use_pair_norm=False))
    ref = jax_reference(a_hat, x, w1, b1, w2, b2, use_pair_norm=False)
    assert out.shape == (N, C_OUT)
    # bf16 MXU operands (f32 accumulation) -> compare against the f32 reference
    # at ~1e-2-level tolerance.
    assert jnp.allclose(out, ref, atol=5e-2, rtol=5e-2), "mismatch vs reference"

    out_pn = jax.block_until_ready(
        gcn_forward(a_hat, x, w1, b1, w2, b2, use_pair_norm=True))
    ref_pn = jax_reference(a_hat, x, w1, b1, w2, b2, use_pair_norm=True)
    assert jnp.allclose(out_pn, ref_pn, atol=5e-2, rtol=5e-2), "pairnorm mismatch"

    print("KERNEL_OK")
</pallas_src>

<mosaic_0001>
module attributes {stable_mosaic.version = 11 : i64} {
  func.func @_gcn_layer1_kernel(%arg0: i32, %arg1: i32, %arg2: memref<128x128xbf16, #tpu.memory_space<vmem>>, %arg3: memref<128x16xbf16, #tpu.memory_space<vmem>>, %arg4: memref<16x32xbf16, #tpu.memory_space<vmem>>, %arg5: memref<1x32xf32, #tpu.memory_space<vmem>>, %arg6: memref<32x128xbf16, #tpu.memory_space<vmem>>, %arg7: memref<128x128xbf16, #tpu.memory_space<vmem>>, %arg8: memref<128x16xf32, #tpu.memory_space<vmem>>) attributes {dimension_semantics = [#tpu.dimension_semantics<parallel>, #tpu.dimension_semantics<arbitrary>], iteration_bounds = array<i64: 2, 2>, scalar_prefetch = 0 : i64, scratch_operands = 1 : i64, tpu.core_type = #tpu.core_type<tc>, window_params = [{transform_indices = @transform_0, window_bounds = array<i64: 128, 128>}, {transform_indices = @transform_1, window_bounds = array<i64: 128, 16>}, {pipeline_mode = #tpu.pipeline_mode<synchronous>, transform_indices = @transform_2, window_bounds = array<i64: 16, 32>}, {pipeline_mode = #tpu.pipeline_mode<synchronous>, transform_indices = @transform_3, window_bounds = array<i64: 1, 32>}, {pipeline_mode = #tpu.pipeline_mode<synchronous>, transform_indices = @transform_4, window_bounds = array<i64: 32, 128>}, {transform_indices = @transform_5, window_bounds = array<i64: 128, 128>}]} {
    %c0_i32 = arith.constant 0 : i32
    %0 = arith.cmpi eq, %arg1, %c0_i32 : i32
    %1 = arith.extui %0 : i1 to i32
    %c0_i32_0 = arith.constant 0 : i32
    %2 = arith.cmpi ne, %1, %c0_i32_0 : i32
    scf.if %2 {
      %cst_9 = arith.constant 0.000000e+00 : f32
      %12 = vector.broadcast %cst_9 : f32 to vector<128x16xf32>
      %c0_10 = arith.constant 0 : index
      %c0_11 = arith.constant 0 : index
      %13 = vector.load %arg8[%c0_10, %c0_11] : memref<128x16xf32, #tpu.memory_space<vmem>>, vector<128x16xf32>
      tpu.vector_store %arg8[%c0_10, %c0_11], %12 {strides = array<i32>} : memref<128x16xf32, #tpu.memory_space<vmem>>, vector<128x16xf32>,
    } else {
    }
    %c0 = arith.constant 0 : index
    %c0_1 = arith.constant 0 : index
    %3 = vector.load %arg8[%c0, %c0_1] : memref<128x16xf32, #tpu.memory_space<vmem>>, vector<128x16xf32>
    %c0_2 = arith.constant 0 : index
    %c0_3 = arith.constant 0 : index
    %4 = vector.load %arg2[%c0_2, %c0_3] : memref<128x128xbf16, #tpu.memory_space<vmem>>, vector<128x128xbf16>
    %c0_4 = arith.constant 0 : index
    %c0_5 = arith.constant 0 : index
    %5 = vector.load %arg3[%c0_4, %c0_5] : memref<128x16xbf16, #tpu.memory_space<vmem>>, vector<128x16xbf16>
    %cst = arith.constant dense<0.000000e+00> : vector<128x16xf32>
    %6 = tpu.matmul %4, %5, %cst {dimension_numbers = #tpu.dot_dimension_numbers<[1], [0], [0], [1], [0, 0, 1, 1], [], []>} : vector<128x128xbf16>, vector<128x16xbf16>, vector<128x16xf32> -> vector<128x16xf32>
    %7 = arith.addf %3, %6 : vector<128x16xf32>
    %c0_6 = arith.constant 0 : index
    %c0_7 = arith.constant 0 : index
    %8 = vector.load %arg8[%c0_6, %c0_7] : memref<128x16xf32, #tpu.memory_space<vmem>>, vector<128x16xf32>
    tpu.vector_store %arg8[%c0_6, %c0_7], %7 {strides = array<i32>} : memref<128x16xf32, #tpu.memory_space<vmem>>, vector<128x16xf32>,
    %c1_i32 = arith.constant 1 : i32
    %9 = arith.cmpi eq, %arg1, %c1_i32 : i32
    %10 = arith.extui %9 : i1 to i32
    %c0_i32_8 = arith.constant 0 : i32
    %11 = arith.cmpi ne, %10, %c0_i32_8 : i32
    scf.if %11 {
      %c0_9 = arith.constant 0 : index
      %c0_10 = arith.constant 0 : index
      %12 = vector.load %arg8[%c0_9, %c0_10] : memref<128x16xf32, #tpu.memory_space<vmem>>, vector<128x16xf32>
      %13 = arith.truncf %12 : vector<128x16xf32> to vector<128x16xbf16>
      %c0_11 = arith.constant 0 : index
      %c0_12 = arith.constant 0 : index
      %14 = vector.load %arg4[%c0_11, %c0_12] : memref<16x32xbf16, #tpu.memory_space<vmem>>, vector<16x32xbf16>
      %cst_13 = arith.constant dense<0.000000e+00> : vector<128x32xf32>
      %15 = tpu.matmul %13, %14, %cst_13 {dimension_numbers = #tpu.dot_dimension_numbers<[1], [0], [0], [1], [0, 0, 1, 1], [], []>} : vector<128x16xbf16>, vector<16x32xbf16>, vector<128x32xf32> -> vector<128x32xf32>
      %c0_14 = arith.constant 0 : index
      %c0_15 = arith.constant 0 : index
      %16 = vector.load %arg5[%c0_14, %c0_15] : memref<1x32xf32, #tpu.memory_space<vmem>>, vector<1x32xf32>
      %17 = vector.broadcast %16 : vector<1x32xf32> to vector<128x32xf32>
      %18 = arith.addf %15, %17 : vector<128x32xf32>
      %cst_16 = arith.constant 0.000000e+00 : f32
      %19 = vector.broadcast %cst_16 : f32 to vector<128x32xf32>
      %20 = arith.maximumf %18, %19 : vector<128x32xf32>
      %21 = arith.truncf %20 : vector<128x32xf32> to vector<128x32xbf16>
      %c0_17 = arith.constant 0 : index
      %c0_18 = arith.constant 0 : index
      %22 = vector.load %arg6[%c0_17, %c0_18] : memref<32x128xbf16, #tpu.memory_space<vmem>>, vector<32x128xbf16>
      %cst_19 = arith.constant dense<0.000000e+00> : vector<128x128xf32>
      %23 = tpu.matmul %21, %22, %cst_19 {dimension_numbers = #tpu.dot_dimension_numbers<[1], [0], [0], [1], [0, 0, 1, 1], [], []>} : vector<128x32xbf16>, vector<32x128xbf16>, vector<128x128xf32> -> vector<128x128xf32>
      %24 = arith.truncf %23 : vector<128x128xf32> to vector<128x128xbf16>
      %c0_20 = arith.constant 0 : index
      %c0_21 = arith.constant 0 : index
      %25 = vector.load %arg7[%c0_20, %c0_21] : memref<128x128xbf16, #tpu.memory_space<vmem>>, vector<128x128xbf16>
      tpu.vector_store %arg7[%c0_20, %c0_21], %24 {strides = array<i32>} : memref<128x128xbf16, #tpu.memory_space<vmem>>, vector<128x128xbf16>,
    } else {
    }
    return
  }
  func.func @transform_0(%arg0: i32, %arg1: i32) -> (i32, i32) {
    %c0_i32 = arith.constant 0 : i32
    return %arg0, %arg1 : i32, i32
  }
  func.func @transform_1(%arg0: i32, %arg1: i32) -> (i32, i32) {
    %c0_i32 = arith.constant 0 : i32
    %c0_i32_0 = arith.constant 0 : i32
    return %arg1, %c0_i32 : i32, i32
  }
  func.func @transform_2(%arg0: i32, %arg1: i32) -> (i32, i32) {
    %c0_i32 = arith.constant 0 : i32
    %c0_i32_0 = arith.constant 0 : i32
    %c0_i32_1 = arith.constant 0 : i32
    return %c0_i32, %c0_i32_0 : i32, i32
  }
  func.func @transform_3(%arg0: i32, %arg1: i32) -> (i32, i32) {
    %c0_i32 = arith.constant 0 : i32
    %c0_i32_0 = arith.constant 0 : i32
    %c0_i32_1 = arith.constant 0 : i32
    return %c0_i32, %c0_i32_0 : i32, i32
  }
  func.func @transform_4(%arg0: i32, %arg1: i32) -> (i32, i32) {
    %c0_i32 = arith.constant 0 : i32
    %c0_i32_0 = arith.constant 0 : i32
    %c0_i32_1 = arith.constant 0 : i32
    return %c0_i32, %c0_i32_0 : i32, i32
  }
  func.func @transform_5(%arg0: i32, %arg1: i32) -> (i32, i32) {
    %c0_i32 = arith.constant 0 : i32
    %c0_i32_0 = arith.constant 0 : i32
    return %arg0, %c0_i32 : i32, i32
  }
}

</mosaic_0001>

<llo_original>
// kernel: tpu_custom_call.1
$region0: #{tpu_custom_call.1}
  #allocation0 [shape = 'u32[]', space=smem, size = 0x4, offset = 0x4, fixed_abs, tag = 'smem constant byte address 0x4 - core index']
  #allocation1 [shape = 'u32[144,128]{1,0:T(1,128)}', space=vmem, size = 0x12000, scoped, tag = 'internal scratch']
  #allocation2 [shape = 'f32[128,16]{1,0:T(8,128)}', space=vmem, size = 0x10000, scoped, tag = 'scratch operand']
  %s0 = inlined_call_operand.hbm [shape: bf16[256,256], index: 0, kind: input, shape index: {}]
  %s1 = inlined_call_operand.vmem [shape: bf16[256,16], index: 1, kind: input, shape index: {}]
  %s2 = inlined_call_operand.vmem [shape: bf16[16,32], index: 2, kind: input, shape index: {}]
  %s3 = inlined_call_operand.vmem [shape: f32[1,32], index: 3, kind: input, shape index: {}]
  %s4 = inlined_call_operand.vmem [shape: bf16[32,128], index: 4, kind: input, shape index: {}]
  %s5 = inlined_call_operand.hbm [shape: bf16[256,128], index: 5, kind: output, shape index: {}]
  %s6 = sld [smem:[#allocation0]]
  $region65: #{tpu_custom_call.1} parent=0
    _
  %s8 = ssub.s32 1, %s6
  %s9 = scalar_select 0, %s8, %s6
  $region1: #{tpu_custom_call.1} parent=0
    #allocation3 [shape = 'u8[65536]{0}', space=vmem, size = 0x10000, scoped, tag = 'input window, operand 0']
    #allocation4 [shape = 's32[2]{0}', space=sflag, size = 0x8, scoped, tag = 'scoped memory for tpu_custom_call.1']
    #allocation5 [shape = 's32[2]{0}', space=sflag, size = 0x8, scoped, tag = 'scoped memory for tpu_custom_call.1']
    #allocation6 [shape = 'u8[65536]{0}', space=vmem, size = 0x10000, scoped, tag = 'output window, operand 0']
    %10 = vsyncpa [#allocation4], 0
    %s11 = scalar_lea.sflag [#allocation4], 1
    %12 = vsyncpa %s11, 0
    %13 = vsyncpa [#allocation5], 0
    %s14 = scalar_lea.sflag [#allocation5], 1
    %15 = vsyncpa %s14, 0
    loop: start=0, step=1, limit=6
    $region2: #{tpu_custom_call.1} parent=1 // loop_pre_header
      _
    $region3: #{tpu_custom_call.1} parent=1 // loop_header
      %s17 = sphi 0, %s21
      %p18 = scmp.ge.s32.totalorder %s17, 6
      %s24 = sphi 0, %s36
      %s25 = sphi 0, %s32
      %s26 = sphi 0, %s24
      %s27 = sphi 0, %s25
      %s28 = sphi 0, %s26
      %s29 = sphi 0, %s27
      %s41 = sphi 0, %s43
      %s44 = sphi 0, %s41
      %s45 = sphi 0, %s44
      %s61 = sphi 0, %s45
      %s67 = sphi 0, %s69
      %s70 = sphi 0, %s67
      %s71 = sphi 0, %s70
      %s87 = sphi 0, %s71
      %s91 = sphi 0, %s91
      %s93 = sphi 0, %s91
      %s94 = sphi 0, %s93
      %s108 = sphi 0, %s94
      %s112 = sphi 0, %s112
      %s114 = sphi 0, %s112
      %s115 = sphi 0, %s114
      %s129 = sphi 0, %s115
      %s133 = sphi 0, %s133
      %s135 = sphi 0, %s133
      %s136 = sphi 0, %s135
      %s150 = sphi 0, %s136
      %s156 = sphi 0, %s158
      %s159 = sphi 0, %s156
      %s160 = sphi 0, %s159
      %s176 = sphi 0, %s160
    $region4: #{tpu_custom_call.1} parent=1 // loop_header_branch
      %20 = sbr.rel (%p18) target = $region8
    $region5: #{tpu_custom_call.1} parent=1 // loop_body
      %s22 = ssub.s32 %s17, 1
      %s23 = ssub.s32 %s17, 2
      %s30 = sadd.s32 1, %s25
      %p31 = scmp.ge.s32.totalorder %s30, 2
      %s32 = scalar_select %p31, 0, %s30
      %s33 = sadd.s32 1, %s24
      %s34 = scalar_select %p31, %s33, %s24
      %p35 = scmp.ge.s32.totalorder %s34, 2
      %s36 = scalar_select %p35, 0, %s34
      %s37 = ssub.s32 %s24, %s36
      %s38 = ssub.s32 %s25, %s32
      %s39 = sor.u32 %s37, %s38
      %p40 = scmp.eq.s32.totalorder %s39, 0
      %s42 = sadd.s32 %s41, 1
      %s43 = scalar_select %p40, %s41, %s42
      %p46 = pneg %p40
      %p47 = scmp.eq.s32.totalorder %s17, 3
      %p48 = por %p46, %p47
      %p49 = scmp.ne.s32.totalorder %s41, %s44
      %p50 = scmp.eq.s32.totalorder %s17, 0
      %p51 = por %p49, %p50
      %p52 = scmp.ne.s32.totalorder %s41, %s44
      %p53 = scmp.eq.s32.totalorder %s22, 3
      %p54 = por %p52, %p53
      %p55 = scmp.ne.s32.totalorder %s44, %s45
      %p56 = scmp.eq.s32.totalorder %s22, 0
      %p57 = por %p55, %p56
      %p58 = scmp.ne.s32.totalorder %s44, %s45
      %p59 = scmp.eq.s32.totalorder %s23, 3
      %p60 = por %p58, %p59
      %p62 = scmp.ne.s32.totalorder %s45, %s61
      %p63 = scmp.eq.s32.totalorder %s23, 0
      %p64 = por %p62, %p63
      %s65 = ssub.s32 %s25, %s32
      %p66 = scmp.eq.s32.totalorder %s65, 0
      %s68 = sadd.s32 %s67, 1
      %s69 = scalar_select %p66, %s67, %s68
      %p72 = pneg %p66
      %p73 = scmp.eq.s32.totalorder %s17, 3
      %p74 = por %p72, %p73
      %p75 = scmp.ne.s32.totalorder %s67, %s70
      %p76 = scmp.eq.s32.totalorder %s17, 0
      %p77 = por %p75, %p76
      %p78 = scmp.ne.s32.totalorder %s67, %s70
      %p79 = scmp.eq.s32.totalorder %s22, 3
      %p80 = por %p78, %p79
      %p81 = scmp.ne.s32.totalorder %s70, %s71
      %p82 = scmp.eq.s32.totalorder %s22, 0
      %p83 = por %p81, %p82
      %p84 = scmp.ne.s32.totalorder %s70, %s71
      %p85 = scmp.eq.s32.totalorder %s23, 3
      %p86 = por %p84, %p85
      %p88 = scmp.ne.s32.totalorder %s71, %s87
      %p89 = scmp.eq.s32.totalorder %s23, 0
      %p90 = por %p88, %p89
      %s92 = sadd.s32 %s91, 1
      %p95 = scmp.eq.s32.totalorder %s17, 3
      %p96 = scmp.ne.s32.totalorder %s91, %s93
      %p97 = scmp.eq.s32.totalorder %s17, 0
      %p98 = por %p96, %p97
      %p99 = scmp.ne.s32.totalorder %s91, %s93
      %p100 = scmp.eq.s32.totalorder %s22, 3
      %p101 = por %p99, %p100
      %p102 = scmp.ne.s32.totalorder %s93, %s94
      %p103 = scmp.eq.s32.totalorder %s22, 0
      %p104 = por %p102, %p103
      %p105 = scmp.ne.s32.totalorder %s93, %s94
      %p106 = scmp.eq.s32.totalorder %s23, 3
      %p107 = por %p105, %p106
      %p109 = scmp.ne.s32.totalorder %s94, %s108
      %p110 = scmp.eq.s32.totalorder %s23, 0
      %p111 = por %p109, %p110
      %s113 = sadd.s32 %s112, 1
      %p116 = scmp.eq.s32.totalorder %s17, 3
      %p117 = scmp.ne.s32.totalorder %s112, %s114
      %p118 = scmp.eq.s32.totalorder %s17, 0
      %p119 = por %p117, %p118
      %p120 = scmp.ne.s32.totalorder %s112, %s114
      %p121 = scmp.eq.s32.totalorder %s22, 3
      %p122 = por %p120, %p121
      %p123 = scmp.ne.s32.totalorder %s114, %s115
      %p124 = scmp.eq.s32.totalorder %s22, 0
      %p125 = por %p123, %p124
      %p126 = scmp.ne.s32.totalorder %s114, %s115
      %p127 = scmp.eq.s32.totalorder %s23, 3
      %p128 = por %p126, %p127
      %p130 = scmp.ne.s32.totalorder %s115, %s129
      %p131 = scmp.eq.s32.totalorder %s23, 0
      %p132 = por %p130, %p131
      %s134 = sadd.s32 %s133, 1
      %p137 = scmp.eq.s32.totalorder %s17, 3
      %p138 = scmp.ne.s32.totalorder %s133, %s135
      %p139 = scmp.eq.s32.totalorder %s17, 0
      %p140 = por %p138, %p139
      %p141 = scmp.ne.s32.totalorder %s133, %s135
      %p142 = scmp.eq.s32.totalorder %s22, 3
      %p143 = por %p141, %p142
      %p144 = scmp.ne.s32.totalorder %s135, %s136
      %p145 = scmp.eq.s32.totalorder %s22, 0
      %p146 = por %p144, %p145
      %p147 = scmp.ne.s32.totalorder %s135, %s136
      %p148 = scmp.eq.s32.totalorder %s23, 3
      %p149 = por %p147, %p148
      %p151 = scmp.ne.s32.totalorder %s136, %s150
      %p152 = scmp.eq.s32.totalorder %s23, 0
      %p153 = por %p151, %p152
      %s154 = ssub.s32 %s24, %s36
      %p155 = scmp.eq.s32.totalorder %s154, 0
      %s157 = sadd.s32 %s156, 1
      %s158 = scalar_select %p155, %s156, %s157
      %p161 = pneg %p155
      %p162 = scmp.eq.s32.totalorder %s17, 3
      %p163 = por %p161, %p162
      %p164 = scmp.ne.s32.totalorder %s156, %s159
      %p165 = scmp.eq.s32.totalorder %s17, 0
      %p166 = por %p164, %p165
      %p167 = scmp.ne.s32.totalorder %s156, %s159
      %p168 = scmp.eq.s32.totalorder %s22, 3
      %p169 = por %p167, %p168
      %p170 = scmp.ne.s32.totalorder %s159, %s160
      %p171 = scmp.eq.s32.totalorder %s22, 0
      %p172 = por %p170, %p171
      %p173 = scmp.ne.s32.totalorder %s159, %s160
      %p174 = scmp.eq.s32.totalorder %s23, 3
      %p175 = por %p173, %p174
      %p177 = scmp.ne.s32.totalorder %s160, %s176
      %p178 = scmp.eq.s32.totalorder %s23, 0
      %p179 = por %p177, %p178
      %p180 = scmp.le.s32.totalorder 1, %s17
      %p181 = scmp.lt.s32.totalorder %s17, 5
      %p182 = pnand %p180, %p181
      %p183 = pneg %p182
      // Predicated region
      $region9: #{tpu_custom_call.1} parent=5 // pred_check
        _
      $region10: #{tpu_custom_call.1} parent=5 // pred_check_branch
        %185 = sbr.rel (%p182) target = $region12
      $region11: #{tpu_custom_call.1} parent=5 // pred_region
        %s186 = ssub.s32 %s17, 1
        // Predicated region
        $region13: #{tpu_custom_call.1} parent=11 // pred_check
          %p187 = pneg %p104
        $region14: #{tpu_custom_call.1} parent=11 // pred_check_branch
          %189 = sbr.rel (%p187) target = $region16
        $region15: #{tpu_custom_call.1} parent=11 // pred_region
          _
        $region16: #{tpu_custom_call.1} parent=11 // pred_fallthru
          _
        // Predicated region
        $region17: #{tpu_custom_call.1} parent=11 // pred_check
          %p190 = pneg %p125
        $region18: #{tpu_custom_call.1} parent=11 // pred_check_branch
          %192 = sbr.rel (%p190) target = $region20
        $region19: #{tpu_custom_call.1} parent=11 // pred_region
          _
        $region20: #{tpu_custom_call.1} parent=11 // pred_fallthru
          _
        // Predicated region
        $region21: #{tpu_custom_call.1} parent=11 // pred_check
          %p193 = pneg %p146
        $region22: #{tpu_custom_call.1} parent=11 // pred_check_branch
          %195 = sbr.rel (%p193) target = $region24
        $region23: #{tpu_custom_call.1} parent=11 // pred_region
          _
        $region24: #{tpu_custom_call.1} parent=11 // pred_fallthru
          _
      $region12: #{tpu_custom_call.1} parent=5 // pred_fallthru
        _
      %p196 = scmp.lt.s32.totalorder %s17, 4
      // Predicated region
      $region25: #{tpu_custom_call.1} parent=5 // pred_check
        %p197 = pneg %p196
      $region26: #{tpu_custom_call.1} parent=5 // pred_check_branch
        %199 = sbr.rel (%p197) target = $region28
      $region27: #{tpu_custom_call.1} parent=5 // pred_region
        // Predicated region
        $region29: #{tpu_custom_call.1} parent=27 // pred_check
          %p200 = pneg %p51
        $region30: #{tpu_custom_call.1} parent=27 // pred_check_branch
          %202 = sbr.rel (%p200) target = $region32
        $region31: #{tpu_custom_call.1} parent=27 // pred_region
          %s203 = sand.u32 %s41, 1
          %s204 = scalar_lea.sflag [#allocation4], %s203
          %s205 = sand.u32 %s41, 1
          %s206 = smul.addr %s205, 64
          %s207 = scalar_lea.vmem [#allocation3], %s206
          %s208 = smul.u32 16, %s24
          %s210 = ssub.s32 1024, 1024
          %211 = vsyncadd %s204, %s210
          %s212 = smul.addr %s208, 2
          %s213 = sadd.s32 %s25, %s212
          %s214 = smul.addr %s213, 64
          %s215 = scalar_lea.hbm %s0, %s214
          %s216 = sshll.u32 %s207, 4
          %s217 = int_to_ptr.vmem [resolvable:$true] %s216
          %222 = dma.hbm_to_vmem [thread:$0]  %s215, 1024, %s217, %s204, 128, 64, 4
        $region32: #{tpu_custom_call.1} parent=27 // pred_fallthru
          _
        // Predicated region
        $region33: #{tpu_custom_call.1} parent=27 // pred_check
          %p223 = pneg %p77
        $region34: #{tpu_custom_call.1} parent=27 // pred_check_branch
          %225 = sbr.rel (%p223) target = $region36
        $region35: #{tpu_custom_call.1} parent=27 // pred_region
          %s226 = smul.u32 16, %s25
          %p227 = scmp.lt.s32.totalorder %s226, 31
          %s228 = scalar_select %p227, %s226, 31
          %s229 = smul.addr %s228, 4
          %s230 = scalar_lea.vmem %s1, %s229
          %s231 = smul.u32 16, %s25
        $region36: #{tpu_custom_call.1} parent=27 // pred_fallthru
          _
      $region28: #{tpu_custom_call.1} parent=5 // pred_fallthru
        _
      %p232 = scmp.le.s32.totalorder 1, %s17
      %p233 = scmp.lt.s32.totalorder %s17, 5
      %p234 = pnand %p232, %p233
      %p235 = pneg %p234
      // Predicated region
      $region37: #{tpu_custom_call.1} parent=5 // pred_check
        _
      $region38: #{tpu_custom_call.1} parent=5 // pred_check_branch
        %237 = sbr.rel (%p234) target = $region40
      $region39: #{tpu_custom_call.1} parent=5 // pred_region
        %s238 = ssub.s32 %s17, 1
        %s239 = sand.u32 %s44, 1
        %s240 = scalar_lea.sflag [#allocation4], %s239
        %s241 = sand.u32 %s44, 1
        %s242 = smul.addr %s241, 64
        %s243 = scalar_lea.vmem [#allocation3], %s242
        // Predicated region
        $region41: #{tpu_custom_call.1} parent=39 // pred_check
          %p244 = pneg %p57
        $region42: #{tpu_custom_call.1} parent=39 // pred_check_branch
          %246 = sbr.rel (%p244) target = $region44
        $region43: #{tpu_custom_call.1} parent=39 // pred_region
          %247 = dma.done %s240, 1024
        $region44: #{tpu_custom_call.1} parent=39 // pred_fallthru
          _
        %s248 = sand.u32 %s44, 1
        %s249 = scalar_lea.sflag [#allocation4], %s248
        %s250 = sand.u32 %s44, 1
        %s251 = smul.addr %s250, 64
        %s252 = scalar_lea.vmem [#allocation3], %s251
        %p253 = pneg %p57
        %p254 = pneg %p54
        %s255 = smul.u32 16, %s27
        %p256 = scmp.lt.s32.totalorder %s255, 31
        %s257 = scalar_select %p256, %s255, 31
        %s258 = smul.addr %s257, 4
        %s259 = scalar_lea.vmem %s1, %s258
        %p260 = pneg %p83
        %p261 = pneg %p80
        %p262 = pneg %p104
        %p263 = pneg %p101
        %p264 = pneg %p125
        %p265 = pneg %p122
        %p266 = pneg %p146
        %p267 = pneg %p143
        %p268 = pneg %p172
        %p269 = pneg %p169
        %s270 = sand.u32 %s159, 1
        %s271 = scalar_lea.sflag [#allocation5], %s270
        %s272 = sand.u32 %s159, 1
        %s273 = smul.addr %s272, 64
        %s274 = scalar_lea.vmem [#allocation6], %s273
        %s275 = smul.u32 16, %s26
        %s276 = smul.u32 16, %s27
        %p277 = scmp.lt.s32.totalorder %s276, 31
        %s278 = scalar_select %p277, %s276, 31
        %s279 = smul.addr %s278, 4
        %s280 = scalar_lea.vmem %s1, %s279
        %s281 = smul.u32 16, %s27
        %s282 = smul.u32 16, %s26
        %p284 = scmp.eq.s32.totalorder %s27, 0
        // Predicated region
        $region45: #{tpu_custom_call.1} parent=39 // pred_check
          %p285 = pneg %p284
        $region46: #{tpu_custom_call.1} parent=39 // pred_check_branch
          %287 = sbr.rel (%p285) target = $region48
        $region47: #{tpu_custom_call.1} parent=39 // pred_region
          %vm288 = vcmask 130048
          %289 = vst.msk [vmem:[#allocation2] sm:$0xff] %vm288, 0.0
          %290 = vst.msk [vmem:[#allocation2 + $0x8] sm:$0xff] %vm288, 0.0
          %291 = vst.msk [vmem:[#allocation2 + $0x10] sm:$0xff] %vm288, 0.0
          %292 = vst.msk [vmem:[#allocation2 + $0x18] sm:$0xff] %vm288, 0.0
          %293 = vst.msk [vmem:[#allocation2 + $0x20] sm:$0xff] %vm288, 0.0
          %294 = vst.msk [vmem:[#allocation2 + $0x28] sm:$0xff] %vm288, 0.0
          %295 = vst.msk [vmem:[#allocation2 + $0x30] sm:$0xff] %vm288, 0.0
          %296 = vst.msk [vmem:[#allocation2 + $0x38] sm:$0xff] %vm288, 0.0
          %297 = vst.msk [vmem:[#allocation2 + $0x40] sm:$0xff] %vm288, 0.0
          %298 = vst.msk [vmem:[#allocation2 + $0x48] sm:$0xff] %vm288, 0.0
          %299 = vst.msk [vmem:[#allocation2 + $0x50] sm:$0xff] %vm288, 0.0
          %300 = vst.msk [vmem:[#allocation2 + $0x58] sm:$0xff] %vm288, 0.0
          %301 = vst.msk [vmem:[#allocation2 + $0x60] sm:$0xff] %vm288, 0.0
          %302 = vst.msk [vmem:[#allocation2 + $0x68] sm:$0xff] %vm288, 0.0
          %303 = vst.msk [vmem:[#allocation2 + $0x70] sm:$0xff] %vm288, 0.0
          %304 = vst.msk [vmem:[#allocation2 + $0x78] sm:$0xff] %vm288, 0.0
        $region48: #{tpu_custom_call.1} parent=39 // pred_fallthru
          _
        %v305 = vld [vmem:[#allocation2] sm:$0xff]
        %v306 = vld [vmem:[#allocation2 + $0x8] sm:$0xff]
        %v307 = vld [vmem:[#allocation2 + $0x10] sm:$0xff]
        %v308 = vld [vmem:[#allocation2 + $0x18] sm:$0xff]
        %v309 = vld [vmem:[#allocation2 + $0x20] sm:$0xff]
        %v310 = vld [vmem:[#allocation2 + $0x28] sm:$0xff]
        %v311 = vld [vmem:[#allocation2 + $0x30] sm:$0xff]
        %v312 = vld [vmem:[#allocation2 + $0x38] sm:$0xff]
        %v313 = vld [vmem:[#allocation2 + $0x40] sm:$0xff]
        %v314 = vld [vmem:[#allocation2 + $0x48] sm:$0xff]
        %v315 = vld [vmem:[#allocation2 + $0x50] sm:$0xff]
        %v316 = vld [vmem:[#allocation2 + $0x58] sm:$0xff]
        %v317 = vld [vmem:[#allocation2 + $0x60] sm:$0xff]
        %v318 = vld [vmem:[#allocation2 + $0x68] sm:$0xff]
        %v319 = vld [vmem:[#allocation2 + $0x70] sm:$0xff]
        %v320 = vld [vmem:[#allocation2 + $0x78] sm:$0xff]
        %v321 = vld [vmem:[%s243] sm:$0xf]
        %v322 = vld [vmem:[%s243 + $0x4] sm:$0xf]
        %v323 = vld [vmem:[%s243 + $0x8] sm:$0xf]
        %v324 = vld [vmem:[%s243 + $0xc] sm:$0xf]
        %v325 = vld [vmem:[%s243 + $0x10] sm:$0xf]
        %v326 = vld [vmem:[%s243 + $0x14] sm:$0xf]
        %v327 = vld [vmem:[%s243 + $0x18] sm:$0xf]
        %v328 = vld [vmem:[%s243 + $0x1c] sm:$0xf]
        %v329 = vld [vmem:[%s243 + $0x20] sm:$0xf]
        %v330 = vld [vmem:[%s243 + $0x24] sm:$0xf]
        %v331 = vld [vmem:[%s243 + $0x28] sm:$0xf]
        %v332 = vld [vmem:[%s243 + $0x2c] sm:$0xf]
        %v333 = vld [vmem:[%s243 + $0x30] sm:$0xf]
        %v334 = vld [vmem:[%s243 + $0x34] sm:$0xf]
        %v335 = vld [vmem:[%s243 + $0x38] sm:$0xf]
        %v336 = vld [vmem:[%s243 + $0x3c] sm:$0xf]
        %v337 = vld [vmem:[%s280] sm:$0xf]
        %v338 = vld [vmem:[%s280 + $0x4] sm:$0xf]
        %v339 = vld [vmem:[%s280 + $0x8] sm:$0xf]
        %v340 = vld [vmem:[%s280 + $0xc] sm:$0xf]
        %v341 = vld [vmem:[%s280 + $0x10] sm:$0xf]
        %v342 = vld [vmem:[%s280 + $0x14] sm:$0xf]
        %v343 = vld [vmem:[%s280 + $0x18] sm:$0xf]
        %v344 = vld [vmem:[%s280 + $0x1c] sm:$0xf]
        %v345 = vld [vmem:[%s280 + $0x20] sm:$0xf]
        %v346 = vld [vmem:[%s280 + $0x24] sm:$0xf]
        %v347 = vld [vmem:[%s280 + $0x28] sm:$0xf]
        %v348 = vld [vmem:[%s280 + $0x2c] sm:$0xf]
        %v349 = vld [vmem:[%s280 + $0x30] sm:$0xf]
        %v350 = vld [vmem:[%s280 + $0x34] sm:$0xf]
        %v351 = vld [vmem:[%s280 + $0x38] sm:$0xf]
        %v352 = vld [vmem:[%s280 + $0x3c] sm:$0xf]
        %v369 = vunpack.c.l.b16 %v321
        %v370 = vunpack.c.l.b16 %v322
        %v371 = vunpack.c.l.b16 %v323
        %v372 = vunpack.c.l.b16 %v324
        %v373 = vunpack.c.l.b16 %v325
        %v374 = vunpack.c.l.b16 %v326
        %v375 = vunpack.c.l.b16 %v327
        %v376 = vunpack.c.l.b16 %v328
        %v377 = vunpack.c.l.b16 %v329
        %v378 = vunpack.c.l.b16 %v330
        %v379 = vunpack.c.l.b16 %v331
        %v380 = vunpack.c.l.b16 %v332
        %v381 = vunpack.c.l.b16 %v333
        %v382 = vunpack.c.l.b16 %v334
        %v383 = vunpack.c.l.b16 %v335
        %v384 = vunpack.c.l.b16 %v336
        %v385 = vpack.c.b16 %v370, %v369
        %v386 = vpack.c.b16 %v372, %v371
        %v387 = vpack.c.b16 %v374, %v373
        %v388 = vpack.c.b16 %v376, %v375
        %v389 = vpack.c.b16 %v378, %v377
        %v390 = vpack.c.b16 %v380, %v379
        %v391 = vpack.c.b16 %v382, %v381
        %v392 = vpack.c.b16 %v384, %v383
        %v417 = vunpack.c.l.b16 %v337
        %v418 = vunpack.c.l.b16 %v338
        %v419 = vunpack.c.l.b16 %v339
        %v420 = vunpack.c.l.b16 %v340
        %v421 = vunpack.c.l.b16 %v341
        %v422 = vunpack.c.l.b16 %v342
        %v423 = vunpack.c.l.b16 %v343
        %v424 = vunpack.c.l.b16 %v344
        %v425 = vunpack.c.l.b16 %v345
        %v426 = vunpack.c.l.b16 %v346
        %v427 = vunpack.c.l.b16 %v347
        %v428 = vunpack.c.l.b16 %v348
        %v429 = vunpack.c.l.b16 %v349
        %v430 = vunpack.c.l.b16 %v350
        %v431 = vunpack.c.l.b16 %v351
        %v432 = vunpack.c.l.b16 %v352
        %v433 = vpack.c.b16 %v418, %v417
        %v434 = vpack.c.b16 %v420, %v419
        %v435 = vpack.c.b16 %v422, %v421
        %v436 = vpack.c.b16 %v424, %v423
        %v437 = vpack.c.b16 %v426, %v425
        %v438 = vpack.c.b16 %v428, %v427
        %v439 = vpack.c.b16 %v430, %v429
        %v440 = vpack.c.b16 %v432, %v431
        %449 = vmatprep.subr.bf16.mxu0 0
        %450 = vmatpush1.bf16.msra.mxu0 %v433
        %451 = vmatprep.subr.bf16.mxu0 0
        %452 = vmatpush1.bf16.msra.mxu0 %v434
        %453 = vmatprep.subr.bf16.mxu0 0
        %454 = vmatpush1.bf16.msra.mxu0 %v435
        %455 = vmatprep.subr.bf16.mxu0 0
        %456 = vmatpush1.bf16.msra.mxu0 %v436
        %457 = vmatprep.subr.bf16.mxu0 0
        %458 = vmatpush1.bf16.msra.mxu0 %v437
        %459 = vmatprep.subr.bf16.mxu0 0
        %460 = vmatpush1.bf16.msra.mxu0 %v438
        %461 = vmatprep.subr.bf16.mxu0 0
        %462 = vmatpush1.bf16.msra.mxu0 %v439
        %463 = vmatprep.subr.bf16.mxu0 0
        %464 = vmatpush1.bf16.msra.mxu0 %v440
        %465 = vmatprep.subr.bf16.mxu0 0
        %466 = vmatpush1.bf16.msra.mxu0 0
        %467 = vmatprep.subr.bf16.mxu0 0
        %468 = vmatpush1.bf16.msra.mxu0 0
        %469 = vmatprep.subr.bf16.mxu0 0
        %470 = vmatpush1.bf16.msra.mxu0 0
        %471 = vmatprep.subr.bf16.mxu0 0
        %472 = vmatpush1.bf16.msra.mxu0 0
        %473 = vmatprep.subr.bf16.mxu0 0
        %474 = vmatpush1.bf16.msra.mxu0 0
        %475 = vmatprep.subr.bf16.mxu0 0
        %476 = vmatpush1.bf16.msra.mxu0 0
        %477 = vmatprep.subr.bf16.mxu0 0
        %478 = vmatpush1.bf16.msra.mxu0 0
        %479 = vmatprep.subr.bf16.mxu0 0
        %480 = vmatpush1.bf16.msra.mxu0 0
        %481 = vmatprep.mubr.bf16.mxu0 0
        %482 = vmatmul.mubr.bf16.gmra.mrb[0].mxu0 %v385
        %v483 = vpop.f32.mrb[0].mxu0
        %v484 = vadd.f32 0.0, %v483
        %v485 = vpop.f32.mrb[0].mxu0
        %v486 = vpop.f32.mrb[0].mxu0
        %v487 = vadd.f32 0.0, %v486
        %v488 = vpop.f32.mrb[0].mxu0
        %489 = vmatprep.mubr.bf16.mxu0 0
        %490 = vmatmul.mubr.bf16.gmra.mrb[0].mxu0 %v386
        %v491 = vpop.f32.mrb[0].mxu0
        %v492 = vadd.f32 0.0, %v491
        %v493 = vpop.f32.mrb[0].mxu0
        %v494 = vpop.f32.mrb[0].mxu0
        %v495 = vadd.f32 0.0, %v494
        %v496 = vpop.f32.mrb[0].mxu0
        %497 = vmatprep.mubr.bf16.mxu0 0
        %498 = vmatmul.mubr.bf16.gmra.mrb[0].mxu0 %v387
        %v499 = vpop.f32.mrb[0].mxu0
        %v500 = vadd.f32 0.0, %v499
        %v501 = vpop.f32.mrb[0].mxu0
        %v502 = vpop.f32.mrb[0].mxu0
        %v503 = vadd.f32 0.0, %v502
        %v504 = vpop.f32.mrb[0].mxu0
        %505 = vmatprep.mubr.bf16.mxu0 0
        %506 = vmatmul.mubr.bf16.gmra.mrb[0].mxu0 %v388
        %v507 = vpop.f32.mrb[0].mxu0
        %v508 = vadd.f32 0.0, %v507
        %v509 = vpop.f32.mrb[0].mxu0
        %v510 = vpop.f32.mrb[0].mxu0
        %v511 = vadd.f32 0.0, %v510
        %v512 = vpop.f32.mrb[0].mxu0
        %513 = vmatprep.mubr.bf16.mxu0 0
        %514 = vmatmul.mubr.bf16.gmra.mrb[0].mxu0 %v389
        %v515 = vpop.f32.mrb[0].mxu0
        %v516 = vadd.f32 0.0, %v515
        %v517 = vpop.f32.mrb[0].mxu0
        %v518 = vpop.f32.mrb[0].mxu0
        %v519 = vadd.f32 0.0, %v518
        %v520 = vpop.f32.mrb[0].mxu0
        %521 = vmatprep.mubr.bf16.mxu0 0
        %522 = vmatmul.mubr.bf16.gmra.mrb[0].mxu0 %v390
        %v523 = vpop.f32.mrb[0].mxu0
        %v524 = vadd.f32 0.0, %v523
        %v525 = vpop.f32.mrb[0].mxu0
        %v526 = vpop.f32.mrb[0].mxu0
        %v527 = vadd.f32 0.0, %v526
        %v528 = vpop.f32.mrb[0].mxu0
        %529 = vmatprep.mubr.bf16.mxu0 0
        %530 = vmatmul.mubr.bf16.gmra.mrb[0].mxu0 %v391
        %v531 = vpop.f32.mrb[0].mxu0
        %v532 = vadd.f32 0.0, %v531
        %v533 = vpop.f32.mrb[0].mxu0
        %v534 = vpop.f32.mrb[0].mxu0
        %v535 = vadd.f32 0.0, %v534
        %v536 = vpop.f32.mrb[0].mxu0
        %537 = vmatprep.mubr.bf16.mxu0 0
        %538 = vmatmul.mubr.bf16.gmra.mrb[0].mxu0 %v392
        %v539 = vpop.f32.mrb[0].mxu0
        %v540 = vadd.f32 0.0, %v539
        %v541 = vpop.f32.mrb[0].mxu0
        %v542 = vpop.f32.mrb[0].mxu0
        %v543 = vadd.f32 0.0, %v542
        %v544 = vpop.f32.mrb[0].mxu0
        %545 = vdwg.mxu0
        %v546 = vadd.f32 %v305, %v484
        %v547 = vadd.f32 %v306, %v487
        %v548 = vadd.f32 %v307, %v492
        %v549 = vadd.f32 %v308, %v495
        %v550 = vadd.f32 %v309, %v500
        %v551 = vadd.f32 %v310, %v503
        %v552 = vadd.f32 %v311, %v508
        %v553 = vadd.f32 %v312, %v511
        %v554 = vadd.f32 %v313, %v516
        %v555 = vadd.f32 %v314, %v519
        %v556 = vadd.f32 %v315, %v524
        %v557 = vadd.f32 %v316, %v527
        %v558 = vadd.f32 %v317, %v532
        %v559 = vadd.f32 %v318, %v535
        %v560 = vadd.f32 %v319, %v540
        %v561 = vadd.f32 %v320, %v543
        %vm562 = vcmask 130048
        %563 = vst.msk [vmem:[#allocation2] sm:$0xff] %vm562, %v546
        %564 = vst.msk [vmem:[#allocation2 + $0x8] sm:$0xff] %vm562, %v547
        %565 = vst.msk [vmem:[#allocation2 + $0x10] sm:$0xff] %vm562, %v548
        %566 = vst.msk [vmem:[#allocation2 + $0x18] sm:$0xff] %vm562, %v549
        %567 = vst.msk [vmem:[#allocation2 + $0x20] sm:$0xff] %vm562, %v550
        %568 = vst.msk [vmem:[#allocation2 + $0x28] sm:$0xff] %vm562, %v551
        %569 = vst.msk [vmem:[#allocation2 + $0x30] sm:$0xff] %vm562, %v552
        %570 = vst.msk [vmem:[#allocation2 + $0x38] sm:$0xff] %vm562, %v553
        %571 = vst.msk [vmem:[#allocation2 + $0x40] sm:$0xff] %vm562, %v554
        %572 = vst.msk [vmem:[#allocation2 + $0x48] sm:$0xff] %vm562, %v555
        %573 = vst.msk [vmem:[#allocation2 + $0x50] sm:$0xff] %vm562, %v556
        %574 = vst.msk [vmem:[#allocation2 + $0x58] sm:$0xff] %vm562, %v557
        %575 = vst.msk [vmem:[#allocation2 + $0x60] sm:$0xff] %vm562, %v558
        %576 = vst.msk [vmem:[#allocation2 + $0x68] sm:$0xff] %vm562, %v559
        %577 = vst.msk [vmem:[#allocation2 + $0x70] sm:$0xff] %vm562, %v560
        %578 = vst.msk [vmem:[#allocation2 + $0x78] sm:$0xff] %vm562, %v561
        %p579 = scmp.eq.s32.totalorder %s27, 1
        // Predicated region
        $region49: #{tpu_custom_call.1} parent=39 // pred_check
          %p580 = pneg %p579
        $region50: #{tpu_custom_call.1} parent=39 // pred_check_branch
          %582 = sbr.rel (%p580) target = $region52
        $region51: #{tpu_custom_call.1} parent=39 // pred_region
          %v583 = vld [vmem:[#allocation2] sm:$0xff]
          %v584 = vld [vmem:[#allocation2 + $0x8] sm:$0xff]
          %v585 = vld [vmem:[#allocation2 + $0x10] sm:$0xff]
          %v586 = vld [vmem:[#allocation2 + $0x18] sm:$0xff]
          %v587 = vld [vmem:[#allocation2 + $0x20] sm:$0xff]
          %v588 = vld [vmem:[#allocation2 + $0x28] sm:$0xff]
          %v589 = vld [vmem:[#allocation2 + $0x30] sm:$0xff]
          %v590 = vld [vmem:[#allocation2 + $0x38] sm:$0xff]
          %v591 = vld [vmem:[#allocation2 + $0x40] sm:$0xff]
          %v592 = vld [vmem:[#allocation2 + $0x48] sm:$0xff]
          %v593 = vld [vmem:[#allocation2 + $0x50] sm:$0xff]
          %v594 = vld [vmem:[#allocation2 + $0x58] sm:$0xff]
          %v595 = vld [vmem:[#allocation2 + $0x60] sm:$0xff]
          %v596 = vld [vmem:[#allocation2 + $0x68] sm:$0xff]
          %v597 = vld [vmem:[#allocation2 + $0x70] sm:$0xff]
          %v598 = vld [vmem:[#allocation2 + $0x78] sm:$0xff]
          %v599 = vpack.c.bf16 %v584, %v583
          %v600 = vpack.c.bf16 %v586, %v585
          %v601 = vpack.c.bf16 %v588, %v587
          %v602 = vpack.c.bf16 %v590, %v589
          %v603 = vpack.c.bf16 %v592, %v591
          %v604 = vpack.c.bf16 %v594, %v593
          %v605 = vpack.c.bf16 %v596, %v595
          %v606 = vpack.c.bf16 %v598, %v597
          %v607 = vld [vmem:[%s2] sm:$0xf]
          %v608 = vld [vmem:[%s2 + $0x4] sm:$0xf]
          %v609 = vld [vmem:[%s3] sm:$0x1]
          %v611 = vlaneseq
          %v612 = vshrl.u32 %v611, 7
          %v613 = vsub.s32 0, %v612
          %v614 = vrot.slane %v609, %v613
          %v618 = vunpack.c.l.b16 %v607
          %v619 = vunpack.c.l.b16 %v608
          %v620 = vpack.c.b16 %v619, %v618
          %v623 = vsel %vm562, %v599, 0
          %v626 = vsel %vm562, %v600, 0
          %v629 = vsel %vm562, %v601, 0
          %v632 = vsel %vm562, %v602, 0
          %v635 = vsel %vm562, %v603, 0
          %v638 = vsel %vm562, %v604, 0
          %v641 = vsel %vm562, %v605, 0
          %v644 = vsel %vm562, %v606, 0
          %646 = vmatprep.subr.bf16.mxu0 0
          %647 = vmatpush1.bf16.msra.mxu0 %v620
          %648 = vmatprep.subr.bf16.mxu0 0
          %649 = vmatpush1.bf16.msra.mxu0 0
          %650 = vmatprep.subr.bf16.mxu0 0
          %651 = vmatpush1.bf16.msra.mxu0 0
          %652 = vmatprep.subr.bf16.mxu0 0
          %653 = vmatpush1.bf16.msra.mxu0 0
          %654 = vmatprep.subr.bf16.mxu0 0
          %655 = vmatpush1.bf16.msra.mxu0 0
          %656 = vmatprep.subr.bf16.mxu0 0
          %657 = vmatpush1.bf16.msra.mxu0 0
          %658 = vmatprep.subr.bf16.mxu0 0
          %659 = vmatpush1.bf16.msra.mxu0 0
          %660 = vmatprep.subr.bf16.mxu0 0
          %661 = vmatpush1.bf16.msra.mxu0 0
          %662 = vmatprep.subr.bf16.mxu0 0
          %663 = vmatpush1.bf16.msra.mxu0 0
          %664 = vmatprep.subr.bf16.mxu0 0
          %665 = vmatpush1.bf16.msra.mxu0 0
          %666 = vmatprep.subr.bf16.mxu0 0
          %667 = vmatpush1.bf16.msra.mxu0 0
          %668 = vmatprep.subr.bf16.mxu0 0
          %669 = vmatpush1.bf16.msra.mxu0 0
          %670 = vmatprep.subr.bf16.mxu0 0
          %671 = vmatpush1.bf16.msra.mxu0 0
          %672 = vmatprep.subr.bf16.mxu0 0
          %673 = vmatpush1.bf16.msra.mxu0 0
          %674 = vmatprep.subr.bf16.mxu0 0
          %675 = vmatpush1.bf16.msra.mxu0 0
          %676 = vmatprep.subr.bf16.mxu0 0
          %677 = vmatpush1.bf16.msra.mxu0 0
          %678 = vmatprep.mubr.bf16.mxu0 0
          %679 = vmatmul.mubr.bf16.gmra.mrb[0].mxu0 %v623
          %v680 = vpop.f32.mrb[0].mxu0
          %v681 = vadd.f32 %v614, %v680
          %v682 = vpop.f32.mrb[0].mxu0
          %v683 = vpop.f32.mrb[0].mxu0
          %v684 = vadd.f32 %v614, %v683
          %v685 = vpop.f32.mrb[0].mxu0
          %686 = vmatprep.mubr.bf16.mxu0 0
          %687 = vmatmul.mubr.bf16.gmra.mrb[0].mxu0 %v626
          %v688 = vpop.f32.mrb[0].mxu0
          %v689 = vadd.f32 %v614, %v688
          %v690 = vpop.f32.mrb[0].mxu0
          %v691 = vpop.f32.mrb[0].mxu0
          %v692 = vadd.f32 %v614, %v691
          %v693 = vpop.f32.mrb[0].mxu0
          %694 = vmatprep.mubr.bf16.mxu0 0
          %695 = vmatmul.mubr.bf16.gmra.mrb[0].mxu0 %v629
          %v696 = vpop.f32.mrb[0].mxu0
          %v697 = vadd.f32 %v614, %v696
          %v698 = vpop.f32.mrb[0].mxu0
          %v699 = vpop.f32.mrb[0].mxu0
          %v700 = vadd.f32 %v614, %v699
          %v701 = vpop.f32.mrb[0].mxu0
          %702 = vmatprep.mubr.bf16.mxu0 0
          %703 = vmatmul.mubr.bf16.gmra.mrb[0].mxu0 %v632
          %v704 = vpop.f32.mrb[0].mxu0
          %v705 = vadd.f32 %v614, %v704
          %v706 = vpop.f32.mrb[0].mxu0
          %v707 = vpop.f32.mrb[0].mxu0
          %v708 = vadd.f32 %v614, %v707
          %v709 = vpop.f32.mrb[0].mxu0
          %710 = vmatprep.mubr.bf16.mxu0 0
          %711 = vmatmul.mubr.bf16.gmra.mrb[0].mxu0 %v635
          %v712 = vpop.f32.mrb[0].mxu0
          %v713 = vadd.f32 %v614, %v712
          %v714 = vpop.f32.mrb[0].mxu0
          %v715 = vpop.f32.mrb[0].mxu0
          %v716 = vadd.f32 %v614, %v715
          %v717 = vpop.f32.mrb[0].mxu0
          %718 = vmatprep.mubr.bf16.mxu0 0
          %719 = vmatmul.mubr.bf16.gmra.mrb[0].mxu0 %v638
          %v720 = vpop.f32.mrb[0].mxu0
          %v721 = vadd.f32 %v614, %v720
          %v722 = vpop.f32.mrb[0].mxu0
          %v723 = vpop.f32.mrb[0].mxu0
          %v724 = vadd.f32 %v614, %v723
          %v725 = vpop.f32.mrb[0].mxu0
          %726 = vmatprep.mubr.bf16.mxu0 0
          %727 = vmatmul.mubr.bf16.gmra.mrb[0].mxu0 %v641
          %v728 = vpop.f32.mrb[0].mxu0
          %v729 = vadd.f32 %v614, %v728
          %v730 = vpop.f32.mrb[0].mxu0
          %v731 = vpop.f32.mrb[0].mxu0
          %v732 = vadd.f32 %v614, %v731
          %v733 = vpop.f32.mrb[0].mxu0
          %734 = vmatprep.mubr.bf16.mxu0 0
          %735 = vmatmul.mubr.bf16.gmra.mrb[0].mxu0 %v644
          %v736 = vpop.f32.mrb[0].mxu0
          %v737 = vadd.f32 %v614, %v736
          %v738 = vpop.f32.mrb[0].mxu0
          %v739 = vpop.f32.mrb[0].mxu0
          %v740 = vadd.f32 %v614, %v739
          %v741 = vpop.f32.mrb[0].mxu0
          %742 = vdwg.mxu0
          %v743 = vmax.f32 %v681, 0.0
          %v744 = vmax.f32 %v684, 0.0
          %v745 = vmax.f32 %v689, 0.0
          %v746 = vmax.f32 %v692, 0.0
          %v747 = vmax.f32 %v697, 0.0
          %v748 = vmax.f32 %v700, 0.0
          %v749 = vmax.f32 %v705, 0.0
          %v750 = vmax.f32 %v708, 0.0
          %v751 = vmax.f32 %v713, 0.0
          %v752 = vmax.f32 %v716, 0.0
          %v753 = vmax.f32 %v721, 0.0
          %v754 = vmax.f32 %v724, 0.0
          %v755 = vmax.f32 %v729, 0.0
          %v756 = vmax.f32 %v732, 0.0
          %v757 = vmax.f32 %v737, 0.0
          %v758 = vmax.f32 %v740, 0.0
          %v759 = vpack.c.bf16 %v744, %v743
          %v760 = vpack.c.bf16 %v746, %v745
          %v761 = vpack.c.bf16 %v748, %v747
          %v762 = vpack.c.bf16 %v750, %v749
          %v763 = vpack.c.bf16 %v752, %v751
          %v764 = vpack.c.bf16 %v754, %v753
          %v765 = vpack.c.bf16 %v756, %v755
          %v766 = vpack.c.bf16 %v758, %v757
          %v767 = vld [vmem:[%s4] sm:$0xf]
          %v768 = vld [vmem:[%s4 + $0x4] sm:$0xf]
          %v769 = vld [vmem:[%s4 + $0x8] sm:$0xf]
          %v770 = vld [vmem:[%s4 + $0xc] sm:$0xf]
          %v775 = vunpack.c.l.b16 %v767
          %v776 = vunpack.c.l.b16 %v768
          %v777 = vunpack.c.l.b16 %v769
          %v778 = vunpack.c.l.b16 %v770
          %v779 = vpack.c.b16 %v776, %v775
          %v780 = vpack.c.b16 %v778, %v777
          %vm783 = vcmask 261120
          %v785 = vsel %vm783, %v759, 0
          %v788 = vsel %vm783, %v760, 0
          %v791 = vsel %vm783, %v761, 0
          %v794 = vsel %vm783, %v762, 0
          %v797 = vsel %vm783, %v763, 0
          %v800 = vsel %vm783, %v764, 0
          %v803 = vsel %vm783, %v765, 0
          %v806 = vsel %vm783, %v766, 0
          %808 = vmatprep.subr.bf16.mxu0 0
          %809 = vmatpush1.bf16.msra.mxu0 %v779
          %810 = vmatprep.subr.bf16.mxu0 0
          %811 = vmatpush1.bf16.msra.mxu0 %v780
          %812 = vmatprep.subr.bf16.mxu0 0
          %813 = vmatpush1.bf16.msra.mxu0 0
          %814 = vmatprep.subr.bf16.mxu0 0
          %815 = vmatpush1.bf16.msra.mxu0 0
          %816 = vmatprep.subr.bf16.mxu0 0
          %817 = vmatpush1.bf16.msra.mxu0 0
          %818 = vmatprep.subr.bf16.mxu0 0
          %819 = vmatpush1.bf16.msra.mxu0 0
          %820 = vmatprep.subr.bf16.mxu0 0
          %821 = vmatpush1.bf16.msra.mxu0 0
          %822 = vmatprep.subr.bf16.mxu0 0
          %823 = vmatpush1.bf16.msra.mxu0 0
          %824 = vmatprep.subr.bf16.mxu0 0
          %825 = vmatpush1.bf16.msra.mxu0 0
          %826 = vmatprep.subr.bf16.mxu0 0
          %827 = vmatpush1.bf16.msra.mxu0 0
          %828 = vmatprep.subr.bf16.mxu0 0
          %829 = vmatpush1.bf16.msra.mxu0 0
          %830 = vmatprep.subr.bf16.mxu0 0
          %831 = vmatpush1.bf16.msra.mxu0 0
          %832 = vmatprep.subr.bf16.mxu0 0
          %833 = vmatpush1.bf16.msra.mxu0 0
          %834 = vmatprep.subr.bf16.mxu0 0
          %835 = vmatpush1.bf16.msra.mxu0 0
          %836 = vmatprep.subr.bf16.mxu0 0
          %837 = vmatpush1.bf16.msra.mxu0 0
          %838 = vmatprep.subr.bf16.mxu0 0
          %839 = vmatpush1.bf16.msra.mxu0 0
          %840 = vmatprep.mubr.bf16.mxu0 0
          %841 = vmatmul.mubr.bf16.gmra.mrb[0].mxu0 %v785
          %v842 = vpop.f32.mrb[0].mxu0
          %v843 = vadd.f32 0.0, %v842
          %v844 = vpop.f32.mrb[0].mxu0
          %v845 = vpop.f32.mrb[0].mxu0
          %v846 = vadd.f32 0.0, %v845
          %v847 = vpop.f32.mrb[0].mxu0
          %848 = vmatprep.mubr.bf16.mxu0 0
          %849 = vmatmul.mubr.bf16.gmra.mrb[0].mxu0 %v788
          %v850 = vpop.f32.mrb[0].mxu0
          %v851 = vadd.f32 0.0, %v850
          %v852 = vpop.f32.mrb[0].mxu0
          %v853 = vpop.f32.mrb[0].mxu0
          %v854 = vadd.f32 0.0, %v853
          %v855 = vpop.f32.mrb[0].mxu0
          %856 = vmatprep.mubr.bf16.mxu0 0
          %857 = vmatmul.mubr.bf16.gmra.mrb[0].mxu0 %v791
          %v858 = vpop.f32.mrb[0].mxu0
          %v859 = vadd.f32 0.0, %v858
          %v860 = vpop.f32.mrb[0].mxu0
          %v861 = vpop.f32.mrb[0].mxu0
          %v862 = vadd.f32 0.0, %v861
          %v863 = vpop.f32.mrb[0].mxu0
          %864 = vmatprep.mubr.bf16.mxu0 0
          %865 = vmatmul.mubr.bf16.gmra.mrb[0].mxu0 %v794
          %v866 = vpop.f32.mrb[0].mxu0
          %v867 = vadd.f32 0.0, %v866
          %v868 = vpop.f32.mrb[0].mxu0
          %v869 = vpop.f32.mrb[0].mxu0
          %v870 = vadd.f32 0.0, %v869
          %v871 = vpop.f32.mrb[0].mxu0
          %872 = vmatprep.mubr.bf16.mxu0 0
          %873 = vmatmul.mubr.bf16.gmra.mrb[0].mxu0 %v797
          %v874 = vpop.f32.mrb[0].mxu0
          %v875 = vadd.f32 0.0, %v874
          %v876 = vpop.f32.mrb[0].mxu0
          %v877 = vpop.f32.mrb[0].mxu0
          %v878 = vadd.f32 0.0, %v877
          %v879 = vpop.f32.mrb[0].mxu0
          %880 = vmatprep.mubr.bf16.mxu0 0
          %881 = vmatmul.mubr.bf16.gmra.mrb[0].mxu0 %v800
          %v882 = vpop.f32.mrb[0].mxu0
          %v883 = vadd.f32 0.0, %v882
          %v884 = vpop.f32.mrb[0].mxu0
          %v885 = vpop.f32.mrb[0].mxu0
          %v886 = vadd.f32 0.0, %v885
          %v887 = vpop.f32.mrb[0].mxu0
          %888 = vmatprep.mubr.bf16.mxu0 0
          %889 = vmatmul.mubr.bf16.gmra.mrb[0].mxu0 %v803
          %v890 = vpop.f32.mrb[0].mxu0
          %v891 = vadd.f32 0.0, %v890
          %v892 = vpop.f32.mrb[0].mxu0
          %v893 = vpop.f32.mrb[0].mxu0
          %v894 = vadd.f32 0.0, %v893
          %v895 = vpop.f32.mrb[0].mxu0
          %896 = vmatprep.mubr.bf16.mxu0 0
          %897 = vmatmul.mubr.bf16.gmra.mrb[0].mxu0 %v806
          %v898 = vpop.f32.mrb[0].mxu0
          %v899 = vadd.f32 0.0, %v898
          %v900 = vpop.f32.mrb[0].mxu0
          %v901 = vpop.f32.mrb[0].mxu0
          %v902 = vadd.f32 0.0, %v901
          %v903 = vpop.f32.mrb[0].mxu0
          %904 = vdwg.mxu0
          %v905 = vpack.c.bf16 %v846, %v843
          %v906 = vpack.c.bf16 %v854, %v851
          %v907 = vpack.c.bf16 %v862, %v859
          %v908 = vpack.c.bf16 %v870, %v867
          %v909 = vpack.c.bf16 %v878, %v875
          %v910 = vpack.c.bf16 %v886, %v883
          %v911 = vpack.c.bf16 %v894, %v891
          %v912 = vpack.c.bf16 %v902, %v899
          %v921 = vunpack.c.l.b16 %v905
          %v922 = vunpack.c.h.b16 %v905
          %v923 = vunpack.c.l.b16 %v906
          %v924 = vunpack.c.h.b16 %v906
          %v925 = vunpack.c.l.b16 %v907
          %v926 = vunpack.c.h.b16 %v907
          %v927 = vunpack.c.l.b16 %v908
          %v928 = vunpack.c.h.b16 %v908
          %v929 = vunpack.c.l.b16 %v909
          %v930 = vunpack.c.h.b16 %v909
          %v931 = vunpack.c.l.b16 %v910
          %v932 = vunpack.c.h.b16 %v910
          %v933 = vunpack.c.l.b16 %v911
          %v934 = vunpack.c.h.b16 %v911
          %v935 = vunpack.c.l.b16 %v912
          %v936 = vunpack.c.h.b16 %v912
          %v937 = vpack.c.b16 %v921, %v921
          %v938 = vpack.c.b16 %v922, %v922
          %v939 = vpack.c.b16 %v923, %v923
          %v940 = vpack.c.b16 %v924, %v924
          %v941 = vpack.c.b16 %v925, %v925
          %v942 = vpack.c.b16 %v926, %v926
          %v943 = vpack.c.b16 %v927, %v927
          %v944 = vpack.c.b16 %v928, %v928
          %v945 = vpack.c.b16 %v929, %v929
          %v946 = vpack.c.b16 %v930, %v930
          %v947 = vpack.c.b16 %v931, %v931
          %v948 = vpack.c.b16 %v932, %v932
          %v949 = vpack.c.b16 %v933, %v933
          %v950 = vpack.c.b16 %v934, %v934
          %v951 = vpack.c.b16 %v935, %v935
          %v952 = vpack.c.b16 %v936, %v936
          %969 = vst [vmem:[%s274] sm:$0xf] %v937
          %970 = vst [vmem:[%s274 + $0x4] sm:$0xf] %v938
          %971 = vst [vmem:[%s274 + $0x8] sm:$0xf] %v939
          %972 = vst [vmem:[%s274 + $0xc] sm:$0xf] %v940
          %973 = vst [vmem:[%s274 + $0x10] sm:$0xf] %v941
          %974 = vst [vmem:[%s274 + $0x14] sm:$0xf] %v942
          %975 = vst [vmem:[%s274 + $0x18] sm:$0xf] %v943
          %976 = vst [vmem:[%s274 + $0x1c] sm:$0xf] %v944
          %977 = vst [vmem:[%s274 + $0x20] sm:$0xf] %v945
          %978 = vst [vmem:[%s274 + $0x24] sm:$0xf] %v946
          %979 = vst [vmem:[%s274 + $0x28] sm:$0xf] %v947
          %980 = vst [vmem:[%s274 + $0x2c] sm:$0xf] %v948
          %981 = vst [vmem:[%s274 + $0x30] sm:$0xf] %v949
          %982 = vst [vmem:[%s274 + $0x34] sm:$0xf] %v950
          %983 = vst [vmem:[%s274 + $0x38] sm:$0xf] %v951
          %984 = vst [vmem:[%s274 + $0x3c] sm:$0xf] %v952
        $region52: #{tpu_custom_call.1} parent=39 // pred_fallthru
          _
        %s985 = sand.u32 %s159, 1
        %s986 = scalar_lea.sflag [#allocation5], %s985
        %s987 = sand.u32 %s159, 1
        %s988 = smul.addr %s987, 64
        %s989 = scalar_lea.vmem [#allocation6], %s988
        // Predicated region
        $region53: #{tpu_custom_call.1} parent=39 // pred_check
          %p990 = pneg %p169
        $region54: #{tpu_custom_call.1} parent=39 // pred_check_branch
          %992 = sbr.rel (%p990) target = $region56
        $region55: #{tpu_custom_call.1} parent=39 // pred_region
          %s993 = smul.u32 16, %s26
          %s995 = ssub.s32 1024, 1024
          %996 = vsyncadd %s986, %s995
          %s997 = smul.addr %s993, 64
          %s998 = scalar_lea.hbm %s5, %s997
          %s999 = sshll.u32 %s989, 4
          %s1000 = int_to_ptr.vmem [resolvable:$true] %s999
          %1005 = dma.vmem_to_hbm [thread:$0]  %s1000, 1024, %s998, %s986, 64, 64, 4
        $region56: #{tpu_custom_call.1} parent=39 // pred_fallthru
          _
      $region40: #{tpu_custom_call.1} parent=5 // pred_fallthru
        _
      %p1006 = scmp.le.s32.totalorder 2, %s17
      // Predicated region
      $region57: #{tpu_custom_call.1} parent=5 // pred_check
        %p1007 = pneg %p1006
      $region58: #{tpu_custom_call.1} parent=5 // pred_check_branch
        %1009 = sbr.rel (%p1007) target = $region60
      $region59: #{tpu_custom_call.1} parent=5 // pred_region
        %s1010 = ssub.s32 %s17, 2
        // Predicated region
        $region61: #{tpu_custom_call.1} parent=59 // pred_check
          %p1011 = pneg %p175
        $region62: #{tpu_custom_call.1} parent=59 // pred_check_branch
          %1013 = sbr.rel (%p1011) target = $region64
        $region63: #{tpu_custom_call.1} parent=59 // pred_region
          %s1014 = sand.u32 %s160, 1
          %s1015 = scalar_lea.sflag [#allocation5], %s1014
          %s1016 = sand.u32 %s160, 1
          %s1017 = smul.addr %s1016, 64
          %s1018 = scalar_lea.vmem [#allocation6], %s1017
          %1019 = dma.done %s1015, 1024
        $region64: #{tpu_custom_call.1} parent=59 // pred_fallthru
          _
      $region60: #{tpu_custom_call.1} parent=5 // pred_fallthru
        _
    $region6: #{tpu_custom_call.1} parent=1 // loop_footer
      %s21 = sadd.s32 1, %s17
    $region7: #{tpu_custom_call.1} parent=1 // loop_footer_branch
      %16 = sbr.rel target = $region3
    $region8: #{tpu_custom_call.1} parent=1 // loop_exit
      _
    %1020 = vsyncpa [#allocation4], 1
    %s1021 = scalar_lea.sflag [#allocation4], 1
    %1022 = vsyncpa %s1021, 1
    %1023 = vsyncpa [#allocation5], 1
    %s1024 = scalar_lea.sflag [#allocation5], 1
    %1025 = vsyncpa %s1024, 1

</llo_original>
